<compile_context>
chip_gen: v5e
topology: v5e:2x2
jax: 0.10.0
libtpu: 0.0.40
codegen_flags: <defaults>
</compile_context>

<pallas_src>
import functools

import jax
import jax.numpy as jnp
from jax.experimental import pallas as pl
from jax.experimental.pallas import tpu as pltpu


def _vmem_limit_bytes():
    """Generation-aware scoped-VMEM budget: ~half of physical, clamped 32..96 MiB."""
    try:
        cap = int(pltpu.get_tpu_info().vmem_capacity_bytes)
        return int(min(96 * 1024 * 1024, max(32 * 1024 * 1024, cap // 2)))
    except Exception:
        return 32 * 1024 * 1024  # proven-safe on all generations


def _pick_group(nblocks, blen, row_cap=512, max_group=16):
    """Windows per kernel-B grid step: a divisor of nblocks, G*blen rows <= cap."""
    for g in range(min(nblocks, max_group), 1, -1):
        if nblocks % g == 0 and g * blen <= row_cap:
            return g
    return 1


# ----------------------------- Pallas kernels -------------------------------

def pw1_glu_kernel(x_ref, w1_ref, b1_ref, o_ref, *, d):
    """Fused pointwise_conv1 + GLU, channel-first output.

    x:  (1, Tt, D)   input tile (already in compute/storage dtype)
    w1: (2D, D)      stacked conv1 weights (out_ch, in_ch)
    b1: (2D, 1) f32  conv1 bias
    o:  (1, D, Tt)   GLU output tile, channel-first (== PyTorch buffer layout)
    """
    x = x_ref[0]                                            # (Tt, D)
    dn = (((1,), (1,)), ((), ()))                           # contract both dim 1
    y = jax.lax.dot_general(w1_ref[...], x, dn,
                            preferred_element_type=jnp.float32) + b1_ref[...]
    o_ref[0] = (y[:d] * jax.nn.sigmoid(y[d:])).astype(o_ref.dtype)


def dw_stats_kernel(hl_ref, hx_ref, wdw_ref, bdw_ref, o_ref, sum_ref, ssq_ref,
                    *, blen, ksize, group):
    """Depthwise conv over `group` consecutive 2*blen windows + fused BN stats.

    hl:  (1, group*blen, D)  H blocks [i*group, (i+1)*group)
    hx:  (1, blen, D)        H block (i+1)*group (right half of the last window)
    wdw: (K, D);  bdw: (1, D)
    o:   (1, group*blen, D)  kept (right-half) depthwise outputs for the group
    sum/ssq: (1, 1, D)       per-batch BN stats (resident accumulator blocks)
    """
    pad = (ksize - 1) // 2
    f32 = jnp.float32
    d = hl_ref.shape[-1]

    @pl.when(pl.program_id(1) == 0)
    def _init():
        sum_ref[...] = jnp.zeros_like(sum_ref)
        ssq_ref[...] = jnp.zeros_like(ssq_ref)

    left = hl_ref[0].astype(f32)                            # (group*blen, D)
    extra = hx_ref[0].astype(f32)                           # (blen, D)
    parts = [left, extra]
    if pad > 0:
        parts.append(jnp.zeros((pad, d), f32))
    u = jnp.concatenate(parts, axis=0)                      # ((group+1)*blen + pad, D)

    w = wdw_ref[...]                                        # (K, D) f32
    bias = bdw_ref[...]                                     # (1, D) f32
    row = jax.lax.broadcasted_iota(jnp.int32, (blen, 1), 0)

    s_acc = jnp.zeros((1, d), f32)
    q_acc = jnp.zeros((1, d), f32)
    for g in range(group):                                  # static unroll
        base = (g + 1) * blen - pad
        acc = jnp.zeros((blen, d), f32) + bias
        for k in range(ksize):                              # static unroll
            sl = u[base + k:base + k + blen, :]
            if k > pad:
                # taps that would read past this window's 2*blen extent are zero
                sl = jnp.where(row < (blen + pad - k), sl, 0.0)
            acc = acc + sl * w[k, :]
        o_ref[0, g * blen:(g + 1) * blen, :] = acc.astype(o_ref.dtype)
        # BN stats from the f32 accumulator (not from the bf16 store).
        s_acc = s_acc + jnp.sum(acc, axis=0, keepdims=True)
        q_acc = q_acc + jnp.sum(acc * acc, axis=0, keepdims=True)

    sum_ref[0] += s_acc
    ssq_ref[0] += q_acc


def bn_relu_pw2_kernel(x_ref, scale_ref, shift_ref, w2t_ref, b2_ref, o_ref,
                       *, compute_dtype):
    """BatchNorm affine (precomputed f32 scale/shift) + ReLU + pointwise_conv2."""
    xn = jnp.maximum(
        x_ref[...].astype(jnp.float32) * scale_ref[...] + shift_ref[...], 0.0)
    y = jnp.dot(xn.astype(compute_dtype), w2t_ref[...],
                preferred_element_type=jnp.float32)
    o_ref[...] = y + b2_ref[...]


# ------------------------------- forward ------------------------------------

def convolution_module_forward(x, params, *, kernel_size, block_len,
                               compute_dtype=jnp.bfloat16):
    """ConvolutionModule.forward (block_len > 0 branch) with Pallas TPU kernels."""
    # TODO(synk): the block_len<=0 (non-blocked) branch of the PyTorch forward
    # is not implemented; this module is exercised with block_len > 0.
    B, time, D = x.shape
    assert (kernel_size - 1) % 2 == 0
    blen = block_len
    assert blen > 0
    pad = (kernel_size - 1) // 2
    assert pad <= blen, "depthwise half-width must not exceed block_len"
    plen = (blen - time % blen) % blen
    xlen = time + plen
    nblocks = xlen // blen
    Tp = blen + xlen            # time length after F.pad(x, (0, 0, blen, plen))
    f32 = jnp.float32
    store_dtype = compute_dtype          # bf16 intermediates on the fast path
    s_bytes = jnp.finfo(store_dtype).bits // 8
    c_bytes = jnp.finfo(compute_dtype).bits // 8
    vmem_limit = _vmem_limit_bytes()

    w1 = params["w1"].astype(compute_dtype)                 # (2D, D)
    b1 = params["b1"].reshape(2 * D, 1).astype(f32)
    wdw = params["wdw"].astype(f32)                         # (K, D)
    bdw = params["bdw"].reshape(1, D).astype(f32)
    w2t = params["w2"].T.astype(compute_dtype)              # (D, D)
    b2 = params["b2"].reshape(1, D).astype(f32)

    # F.pad(x, (0, 0, blen, plen)), fused with the cast to the storage dtype.
    # TODO(synk): this pad (and the final [:, :time] crop) could be folded into
    # kernels A/C with element-offset indexing to save one HBM pass each.
    xpad = jnp.pad(x.astype(store_dtype), ((0, 0), (blen, plen), (0, 0)))

    # ---- kernel A: fused pointwise_conv1 + GLU (channel-first output) -------
    t_tile = Tp if Tp <= 512 else 512          # lane-axis tile: 128-mult or full
    gcf = pl.pallas_call(
        functools.partial(pw1_glu_kernel, d=D),
        out_shape=jax.ShapeDtypeStruct((B, D, Tp), store_dtype),
        grid=(B, pl.cdiv(Tp, t_tile)),
        in_specs=[
            pl.BlockSpec((1, t_tile, D), lambda b, t: (b, t, 0)),
            pl.BlockSpec((2 * D, D), lambda b, t: (0, 0)),   # resident weights
            pl.BlockSpec((2 * D, 1), lambda b, t: (0, 0)),
        ],
        out_specs=pl.BlockSpec((1, D, t_tile), lambda b, t: (b, 0, t)),
        compiler_params=pltpu.CompilerParams(
            dimension_semantics=("parallel", "parallel"),
            vmem_limit_bytes=vmem_limit),
        cost_estimate=pl.CostEstimate(
            flops=int(4 * B * Tp * D * D),
            transcendentals=int(B * Tp * D),
            bytes_accessed=int(2 * B * Tp * D * s_bytes + 2 * D * D * c_bytes)),
    )(xpad, w1, b1)

    # PyTorch `as_strided`: reinterpret the (B, D, Tp)-contiguous GLU buffer as
    # (B, Tp, D).  With a channel-first kernel output this is a bf16 reshape.
    H = gcf.reshape(B, Tp, D)

    # ---- kernel B: grouped depthwise conv windows + per-batch BN stats ------
    # Overlapping windows come straight from BlockSpec index maps (H is passed
    # twice: a G*blen-row left slab at block i and one extra blen-row block at
    # block (i+1)*G) -- no stacked HBM copies, ~(G+1)/G read amplification.
    G = _pick_group(nblocks, blen)
    ngroups = nblocks // G
    dw, bsum, bssq = pl.pallas_call(
        functools.partial(dw_stats_kernel, blen=blen, ksize=kernel_size, group=G),
        out_shape=(
            jax.ShapeDtypeStruct((B, xlen, D), store_dtype),
            jax.ShapeDtypeStruct((B, 1, D), f32),
            jax.ShapeDtypeStruct((B, 1, D), f32),
        ),
        grid=(B, ngroups),
        in_specs=[
            pl.BlockSpec((1, G * blen, D), lambda b, i: (b, i, 0)),
            pl.BlockSpec((1, blen, D), lambda b, i: (b, (i + 1) * G, 0)),
            pl.BlockSpec((kernel_size, D), lambda b, i: (0, 0)),
            pl.BlockSpec((1, D), lambda b, i: (0, 0)),
        ],
        out_specs=(
            pl.BlockSpec((1, G * blen, D), lambda b, i: (b, i, 0)),
            pl.BlockSpec((1, 1, D), lambda b, i: (b, 0, 0)),   # per-batch stats
            pl.BlockSpec((1, 1, D), lambda b, i: (b, 0, 0)),   # (resident blocks)
        ),
        compiler_params=pltpu.CompilerParams(
            # stats are per-batch, so the batch axis is safe to parallelize
            # (v7x megacore); only the window axis carries the accumulator.
            dimension_semantics=("parallel", "arbitrary"),
            vmem_limit_bytes=vmem_limit),
    )(H, H, wdw, bdw)

    # ---- BatchNorm batch stats -> folded scale/shift (tiny (D,) math) -------
    n_rows = B * xlen
    eps = 1e-5
    ssum = jnp.sum(bsum[:, 0, :], axis=0)
    ssq = jnp.sum(bssq[:, 0, :], axis=0)
    mean = ssum / n_rows
    # clamp: guards f32 cancellation in E[x^2] - mean^2 for tiny variances.
    var = jnp.maximum(ssq / n_rows - mean * mean, 0.0)
    inv = jax.lax.rsqrt(var + eps)
    scale = (params["gamma"] * inv).reshape(1, D).astype(f32)
    shift = (params["beta"] - mean * params["gamma"] * inv).reshape(1, D).astype(f32)

    # ---- kernel C: BN normalize + ReLU + pointwise_conv2 (row-tiled) --------
    z = dw.reshape(n_rows, D)
    r_tile = n_rows if n_rows <= 512 else 512
    out = pl.pallas_call(
        functools.partial(bn_relu_pw2_kernel, compute_dtype=compute_dtype),
        out_shape=jax.ShapeDtypeStruct((n_rows, D), f32),
        grid=(pl.cdiv(n_rows, r_tile),),
        in_specs=[
            pl.BlockSpec((r_tile, D), lambda i: (i, 0)),
            pl.BlockSpec((1, D), lambda i: (0, 0)),
            pl.BlockSpec((1, D), lambda i: (0, 0)),
            pl.BlockSpec((D, D), lambda i: (0, 0)),
            pl.BlockSpec((1, D), lambda i: (0, 0)),
        ],
        out_specs=pl.BlockSpec((r_tile, D), lambda i: (i, 0)),
        compiler_params=pltpu.CompilerParams(
            dimension_semantics=("parallel",),
            vmem_limit_bytes=vmem_limit),
        cost_estimate=pl.CostEstimate(
            flops=int(2 * n_rows * D * D),
            transcendentals=0,
            bytes_accessed=int(n_rows * D * (s_bytes + 4) + D * D * c_bytes)),
    )(z, scale, shift, w2t, b2)

    return out.reshape(B, xlen, D)[:, :time, :]


# --------------------------- pure-JAX reference ------------------------------

def reference_forward(x, p, *, kernel_size, block_len):
    B, time, D = x.shape
    blen = block_len
    plen = (blen - time % blen) % blen
    xlen = time + plen
    Tp = blen + xlen
    xp = jnp.pad(x, ((0, 0), (blen, plen), (0, 0)))
    y = xp @ p["w1"].T + p["b1"]
    g = y[..., :D] * jax.nn.sigmoid(y[..., D:])
    H = jnp.transpose(g, (0, 2, 1)).reshape(B, Tp, D)   # PyTorch as_strided scramble
    nb = xlen // blen
    blocks = jnp.stack([H[:, i * blen:(i + 2) * blen] for i in range(nb)], 1)
    blocks = blocks.reshape(B * nb, 2 * blen, D)
    pad = (kernel_size - 1) // 2
    bp = jnp.pad(blocks, ((0, 0), (pad, pad), (0, 0)))
    dw = jnp.zeros((B * nb, blen, D)) + p["bdw"]
    for k in range(kernel_size):
        dw = dw + bp[:, blen + k: blen + k + blen, :] * p["wdw"][k]
    z = dw.reshape(B * xlen, D)
    mean = z.mean(0)
    var = z.var(0)
    zn = (z - mean) / jnp.sqrt(var + 1e-5) * p["gamma"] + p["beta"]
    zn = jnp.maximum(zn, 0.0)
    o = zn @ p["w2"].T + p["b2"]
    return o.reshape(B, xlen, D)[:, :time]


# ---------------------------------- main -------------------------------------

if __name__ == "__main__":
    B, time, D = 2, 16, 32          # (#batch, time, channels)
    kernel_size = 5                 # (kernel_size - 1) % 2 == 0
    block_len = 8

    key = jax.random.PRNGKey(0)
    ks = jax.random.split(key, 9)
    params = {
        "w1": 0.1 * jax.random.normal(ks[0], (2 * D, D), jnp.float32),        # Conv1d(D, 2D, 1)
        "b1": 0.1 * jax.random.normal(ks[1], (2 * D,), jnp.float32),
        "wdw": 0.1 * jax.random.normal(ks[2], (kernel_size, D), jnp.float32),  # depthwise (D,1,K)^T
        "bdw": 0.1 * jax.random.normal(ks[3], (D,), jnp.float32),
        "gamma": 1.0 + 0.1 * jax.random.normal(ks[4], (D,), jnp.float32),
        "beta": 0.1 * jax.random.normal(ks[5], (D,), jnp.float32),
        "w2": 0.1 * jax.random.normal(ks[6], (D, D), jnp.float32),             # Conv1d(D, D, 1)
        "b2": 0.1 * jax.random.normal(ks[7], (D,), jnp.float32),
    }
    x = jax.random.normal(ks[8], (B, time, D), jnp.float32)

    fwd = functools.partial(convolution_module_forward,
                            kernel_size=kernel_size, block_len=block_len)

    # Exactness check: f32 path (f32 intermediates + f32 MXU) vs the reference.
    out_f32 = jax.block_until_ready(fwd(x, params, compute_dtype=jnp.float32))
    # Fast path: bf16 intermediates + bf16 MXU operands with f32 accumulation.
    out_bf16 = jax.block_until_ready(fwd(x, params, compute_dtype=jnp.bfloat16))

    ref = reference_forward(x, params, kernel_size=kernel_size, block_len=block_len)

    assert out_f32.shape == (B, time, D), out_f32.shape
    assert out_bf16.shape == (B, time, D), out_bf16.shape
    assert bool(jnp.all(jnp.isfinite(out_f32)))
    assert bool(jnp.all(jnp.isfinite(out_bf16)))
    err32 = float(jnp.max(jnp.abs(out_f32 - ref)))
    err16 = float(jnp.max(jnp.abs(out_bf16 - ref)))
    assert bool(jnp.allclose(out_f32, ref, atol=1e-3, rtol=1e-3)), err32
    assert bool(jnp.allclose(out_bf16, ref, atol=1e-1, rtol=1e-1)), err16

    print("KERNEL_OK")
</pallas_src>

<mosaic_0001>
module attributes {stable_mosaic.version = 11 : i64} {
  func.func @pw1_glu_kernel(%arg0: i32, %arg1: i32, %arg2: memref<1x24x32xf32, #tpu.memory_space<vmem>>, %arg3: memref<64x32xf32, #tpu.memory_space<vmem>>, %arg4: memref<64x1xf32, #tpu.memory_space<vmem>>, %arg5: memref<1x32x24xf32, #tpu.memory_space<vmem>>) attributes {dimension_semantics = [#tpu.dimension_semantics<parallel>, #tpu.dimension_semantics<parallel>], iteration_bounds = array<i64: 2, 1>, scalar_prefetch = 0 : i64, scratch_operands = 0 : i64, tpu.core_type = #tpu.core_type<tc>, window_params = [{transform_indices = @transform_0, window_bounds = array<i64: 1, 24, 32>}, {pipeline_mode = #tpu.pipeline_mode<synchronous>, transform_indices = @transform_1, window_bounds = array<i64: 64, 32>}, {pipeline_mode = #tpu.pipeline_mode<synchronous>, transform_indices = @transform_2, window_bounds = array<i64: 64, 1>}, {transform_indices = @transform_3, window_bounds = array<i64: 1, 32, 24>}]} {
    %c0 = arith.constant 0 : index
    %c0_0 = arith.constant 0 : index
    %c0_1 = arith.constant 0 : index
    %0 = vector.load %arg2[%c0, %c0_0, %c0_1] : memref<1x24x32xf32, #tpu.memory_space<vmem>>, vector<1x24x32xf32>
    %1 = vector.shape_cast %0 : vector<1x24x32xf32> to vector<24x32xf32>
    %c0_2 = arith.constant 0 : index
    %c0_3 = arith.constant 0 : index
    %2 = vector.load %arg3[%c0_2, %c0_3] : memref<64x32xf32, #tpu.memory_space<vmem>>, vector<64x32xf32>
    %cst = arith.constant dense<0.000000e+00> : vector<64x24xf32>
    %3 = tpu.matmul %2, %1, %cst {dimension_numbers = #tpu.dot_dimension_numbers<[1], [1], [0], [0], [0, 0, 1, 0], [], []>} : vector<64x32xf32>, vector<24x32xf32>, vector<64x24xf32> -> vector<64x24xf32>
    %c0_4 = arith.constant 0 : index
    %c0_5 = arith.constant 0 : index
    %4 = vector.load %arg4[%c0_4, %c0_5] : memref<64x1xf32, #tpu.memory_space<vmem>>, vector<64x1xf32>
    %5 = vector.broadcast %4 : vector<64x1xf32> to vector<64x24xf32>
    %6 = arith.addf %3, %5 : vector<64x24xf32>
    %7 = vector.extract_strided_slice %6 {offsets = [0, 0], sizes = [32, 24], strides = [1, 1]} : vector<64x24xf32> to vector<32x24xf32>
    %8 = vector.extract_strided_slice %6 {offsets = [32, 0], sizes = [32, 24], strides = [1, 1]} : vector<64x24xf32> to vector<32x24xf32>
    %9 = arith.negf %8 : vector<32x24xf32>
    %10 = math.exp %9 : vector<32x24xf32>
    %cst_6 = arith.constant 1.000000e+00 : f32
    %11 = vector.broadcast %cst_6 : f32 to vector<32x24xf32>
    %12 = arith.addf %11, %10 : vector<32x24xf32>
    %13 = arith.divf %11, %12 : vector<32x24xf32>
    %14 = arith.mulf %7, %13 : vector<32x24xf32>
    %c0_7 = arith.constant 0 : index
    %c0_8 = arith.constant 0 : index
    %c0_9 = arith.constant 0 : index
    %15 = vector.load %arg5[%c0_7, %c0_8, %c0_9] : memref<1x32x24xf32, #tpu.memory_space<vmem>>, vector<1x32x24xf32>
    %16 = vector.shape_cast %15 : vector<1x32x24xf32> to vector<32x24xf32>
    %17 = vector.shape_cast %14 : vector<32x24xf32> to vector<1x32x24xf32>
    tpu.vector_store %arg5[%c0_7, %c0_8, %c0_9], %17 {strides = array<i32>} : memref<1x32x24xf32, #tpu.memory_space<vmem>>, vector<1x32x24xf32>,
    return
  }
  func.func @transform_0(%arg0: i32, %arg1: i32) -> (i32, i32, i32) {
    %c0_i32 = arith.constant 0 : i32
    %c0_i32_0 = arith.constant 0 : i32
    return %arg0, %arg1, %c0_i32 : i32, i32, i32
  }
  func.func @transform_1(%arg0: i32, %arg1: i32) -> (i32, i32) {
    %c0_i32 = arith.constant 0 : i32
    %c0_i32_0 = arith.constant 0 : i32
    %c0_i32_1 = arith.constant 0 : i32
    return %c0_i32, %c0_i32_0 : i32, i32
  }
  func.func @transform_2(%arg0: i32, %arg1: i32) -> (i32, i32) {
    %c0_i32 = arith.constant 0 : i32
    %c0_i32_0 = arith.constant 0 : i32
    %c0_i32_1 = arith.constant 0 : i32
    return %c0_i32, %c0_i32_0 : i32, i32
  }
  func.func @transform_3(%arg0: i32, %arg1: i32) -> (i32, i32, i32) {
    %c0_i32 = arith.constant 0 : i32
    %c0_i32_0 = arith.constant 0 : i32
    return %arg0, %c0_i32, %arg1 : i32, i32, i32
  }
}

</mosaic_0001>

<llo_original>
// kernel: tpu_custom_call.1
$region0: #{tpu_custom_call.1}
  #allocation0 [shape = 'u32[]', space=smem, size = 0x4, offset = 0x4, fixed_abs, tag = 'smem constant byte address 0x4 - core index']
  #allocation1 [shape = 'u32[72,128]{1,0:T(1,128)}', space=vmem, size = 0x9000, scoped, tag = 'internal scratch']
  %s0 = inlined_call_operand.vmem [shape: f32[2,24,32], index: 0, kind: input, shape index: {}]
  %s1 = inlined_call_operand.vmem [shape: f32[64,32], index: 1, kind: input, shape index: {}]
  %s2 = inlined_call_operand.vmem [shape: f32[64,1], index: 2, kind: input, shape index: {}]
  %s3 = inlined_call_operand.vmem [shape: f32[2,32,24], index: 3, kind: output, shape index: {}]
  %s4 = sld [smem:[#allocation0]]
  $region45: #{tpu_custom_call.1} parent=0
    _
  %s6 = ssub.s32 1, %s4
  %s7 = scalar_select 0, %s6, %s4
  loop: start=0, step=1, limit=4
  $region2: #{tpu_custom_call.1} parent=0 // loop_pre_header
    _
  $region3: #{tpu_custom_call.1} parent=0 // loop_header
    %s9 = sphi 0, %s13
    %p10 = scmp.ge.s32.totalorder %s9, 4
    %s16 = sphi 0, %s28
    %s17 = sphi 0, %s24
    %s18 = sphi 0, %s16
    %s19 = sphi 0, %s17
    %s20 = sphi 0, %s18
    %s21 = sphi 0, %s19
    %s33 = sphi 0, %s35
    %s36 = sphi 0, %s33
    %s37 = sphi 0, %s36
    %s53 = sphi 0, %s37
    %s57 = sphi 0, %s57
    %s59 = sphi 0, %s57
    %s60 = sphi 0, %s59
    %s74 = sphi 0, %s60
    %s78 = sphi 0, %s78
    %s80 = sphi 0, %s78
    %s81 = sphi 0, %s80
    %s95 = sphi 0, %s81
    %s103 = sphi 0, %s105
    %s106 = sphi 0, %s103
    %s107 = sphi 0, %s106
    %s123 = sphi 0, %s107
  $region4: #{tpu_custom_call.1} parent=0 // loop_header_branch
    %12 = sbr.rel (%p10) target = $region8
  $region5: #{tpu_custom_call.1} parent=0 // loop_body
    %s14 = ssub.s32 %s9, 1
    %s15 = ssub.s32 %s9, 2
    %s22 = sadd.s32 1, %s17
    %p23 = scmp.ge.s32.totalorder %s22, 1
    %s24 = scalar_select %p23, 0, %s22
    %s25 = sadd.s32 1, %s16
    %s26 = scalar_select %p23, %s25, %s16
    %p27 = scmp.ge.s32.totalorder %s26, 2
    %s28 = scalar_select %p27, 0, %s26
    %s29 = ssub.s32 %s16, %s28
    %s30 = ssub.s32 %s17, %s24
    %s31 = sor.u32 %s29, %s30
    %p32 = scmp.eq.s32.totalorder %s31, 0
    %s34 = sadd.s32 %s33, 1
    %s35 = scalar_select %p32, %s33, %s34
    %p38 = pneg %p32
    %p39 = scmp.eq.s32.totalorder %s9, 1
    %p40 = por %p38, %p39
    %p41 = scmp.ne.s32.totalorder %s33, %s36
    %p42 = scmp.eq.s32.totalorder %s9, 0
    %p43 = por %p41, %p42
    %p44 = scmp.ne.s32.totalorder %s33, %s36
    %p45 = scmp.eq.s32.totalorder %s14, 1
    %p46 = por %p44, %p45
    %p47 = scmp.ne.s32.totalorder %s36, %s37
    %p48 = scmp.eq.s32.totalorder %s14, 0
    %p49 = por %p47, %p48
    %p50 = scmp.ne.s32.totalorder %s36, %s37
    %p51 = scmp.eq.s32.totalorder %s15, 1
    %p52 = por %p50, %p51
    %p54 = scmp.ne.s32.totalorder %s37, %s53
    %p55 = scmp.eq.s32.totalorder %s15, 0
    %p56 = por %p54, %p55
    %s58 = sadd.s32 %s57, 1
    %p61 = scmp.eq.s32.totalorder %s9, 1
    %p62 = scmp.ne.s32.totalorder %s57, %s59
    %p63 = scmp.eq.s32.totalorder %s9, 0
    %p64 = por %p62, %p63
    %p65 = scmp.ne.s32.totalorder %s57, %s59
    %p66 = scmp.eq.s32.totalorder %s14, 1
    %p67 = por %p65, %p66
    %p68 = scmp.ne.s32.totalorder %s59, %s60
    %p69 = scmp.eq.s32.totalorder %s14, 0
    %p70 = por %p68, %p69
    %p71 = scmp.ne.s32.totalorder %s59, %s60
    %p72 = scmp.eq.s32.totalorder %s15, 1
    %p73 = por %p71, %p72
    %p75 = scmp.ne.s32.totalorder %s60, %s74
    %p76 = scmp.eq.s32.totalorder %s15, 0
    %p77 = por %p75, %p76
    %s79 = sadd.s32 %s78, 1
    %p82 = scmp.eq.s32.totalorder %s9, 1
    %p83 = scmp.ne.s32.totalorder %s78, %s80
    %p84 = scmp.eq.s32.totalorder %s9, 0
    %p85 = por %p83, %p84
    %p86 = scmp.ne.s32.totalorder %s78, %s80
    %p87 = scmp.eq.s32.totalorder %s14, 1
    %p88 = por %p86, %p87
    %p89 = scmp.ne.s32.totalorder %s80, %s81
    %p90 = scmp.eq.s32.totalorder %s14, 0
    %p91 = por %p89, %p90
    %p92 = scmp.ne.s32.totalorder %s80, %s81
    %p93 = scmp.eq.s32.totalorder %s15, 1
    %p94 = por %p92, %p93
    %p96 = scmp.ne.s32.totalorder %s81, %s95
    %p97 = scmp.eq.s32.totalorder %s15, 0
    %p98 = por %p96, %p97
    %s99 = ssub.s32 %s16, %s28
    %s100 = ssub.s32 %s17, %s24
    %s101 = sor.u32 %s99, %s100
    %p102 = scmp.eq.s32.totalorder %s101, 0
    %s104 = sadd.s32 %s103, 1
    %s105 = scalar_select %p102, %s103, %s104
    %p108 = pneg %p102
    %p109 = scmp.eq.s32.totalorder %s9, 1
    %p110 = por %p108, %p109
    %p111 = scmp.ne.s32.totalorder %s103, %s106
    %p112 = scmp.eq.s32.totalorder %s9, 0
    %p113 = por %p111, %p112
    %p114 = scmp.ne.s32.totalorder %s103, %s106
    %p115 = scmp.eq.s32.totalorder %s14, 1
    %p116 = por %p114, %p115
    %p117 = scmp.ne.s32.totalorder %s106, %s107
    %p118 = scmp.eq.s32.totalorder %s14, 0
    %p119 = por %p117, %p118
    %p120 = scmp.ne.s32.totalorder %s106, %s107
    %p121 = scmp.eq.s32.totalorder %s15, 1
    %p122 = por %p120, %p121
    %p124 = scmp.ne.s32.totalorder %s107, %s123
    %p125 = scmp.eq.s32.totalorder %s15, 0
    %p126 = por %p124, %p125
    %p127 = scmp.le.s32.totalorder 1, %s9
    %p128 = scmp.lt.s32.totalorder %s9, 3
    %p129 = pnand %p127, %p128
    %p130 = pneg %p129
    // Predicated region
    $region9: #{tpu_custom_call.1} parent=5 // pred_check
      _
    $region10: #{tpu_custom_call.1} parent=5 // pred_check_branch
      %132 = sbr.rel (%p129) target = $region12
    $region11: #{tpu_custom_call.1} parent=5 // pred_region
      %s133 = ssub.s32 %s9, 1
      // Predicated region
      $region13: #{tpu_custom_call.1} parent=11 // pred_check
        %p134 = pneg %p70
      $region14: #{tpu_custom_call.1} parent=11 // pred_check_branch
        %136 = sbr.rel (%p134) target = $region16
      $region15: #{tpu_custom_call.1} parent=11 // pred_region
        _
      $region16: #{tpu_custom_call.1} parent=11 // pred_fallthru
        _
      // Predicated region
      $region17: #{tpu_custom_call.1} parent=11 // pred_check
        %p137 = pneg %p91
      $region18: #{tpu_custom_call.1} parent=11 // pred_check_branch
        %139 = sbr.rel (%p137) target = $region20
      $region19: #{tpu_custom_call.1} parent=11 // pred_region
        _
      $region20: #{tpu_custom_call.1} parent=11 // pred_fallthru
        _
    $region12: #{tpu_custom_call.1} parent=5 // pred_fallthru
      _
    %p140 = scmp.lt.s32.totalorder %s9, 2
    // Predicated region
    $region21: #{tpu_custom_call.1} parent=5 // pred_check
      %p141 = pneg %p140
    $region22: #{tpu_custom_call.1} parent=5 // pred_check_branch
      %143 = sbr.rel (%p141) target = $region24
    $region23: #{tpu_custom_call.1} parent=5 // pred_region
      // Predicated region
      $region25: #{tpu_custom_call.1} parent=23 // pred_check
        %p144 = pneg %p43
      $region26: #{tpu_custom_call.1} parent=23 // pred_check_branch
        %146 = sbr.rel (%p144) target = $region28
      $region27: #{tpu_custom_call.1} parent=23 // pred_region
        %s147 = smul.u32 3, %s17
        %p148 = scmp.lt.s32.totalorder %s16, 1
        %s149 = scalar_select %p148, %s16, 1
        %p150 = scmp.lt.s32.totalorder %s147, 2
        %s151 = scalar_select %p150, %s147, 2
        %s152 = smul.addr %s149, 3
        %s153 = sadd.s32 %s151, %s152
        %s154 = smul.addr %s153, 8
        %s155 = scalar_lea.vmem %s0, %s154
        %s156 = smul.u32 3, %s17
      $region28: #{tpu_custom_call.1} parent=23 // pred_fallthru
        _
    $region24: #{tpu_custom_call.1} parent=5 // pred_fallthru
      _
    %p157 = scmp.le.s32.totalorder 1, %s9
    %p158 = scmp.lt.s32.totalorder %s9, 3
    %p159 = pnand %p157, %p158
    %p160 = pneg %p159
    // Predicated region
    $region29: #{tpu_custom_call.1} parent=5 // pred_check
      _
    $region30: #{tpu_custom_call.1} parent=5 // pred_check_branch
      %162 = sbr.rel (%p159) target = $region32
    $region31: #{tpu_custom_call.1} parent=5 // pred_region
      %s163 = ssub.s32 %s9, 1
      %s164 = smul.u32 3, %s19
      %p165 = scmp.lt.s32.totalorder %s18, 1
      %s166 = scalar_select %p165, %s18, 1
      %p167 = scmp.lt.s32.totalorder %s164, 2
      %s168 = scalar_select %p167, %s164, 2
      %s169 = smul.addr %s166, 3
      %s170 = sadd.s32 %s168, %s169
      %s171 = smul.addr %s170, 8
      %s172 = scalar_lea.vmem %s0, %s171
      %p173 = pneg %p49
      %p174 = pneg %p46
      %p175 = pneg %p70
      %p176 = pneg %p67
      %p177 = pneg %p91
      %p178 = pneg %p88
      %p179 = pneg %p119
      %p180 = pneg %p116
      %p181 = scmp.lt.s32.totalorder %s18, 1
      %s182 = scalar_select %p181, %s18, 1
      %p183 = scmp.lt.s32.totalorder %s19, 0
      %s184 = scalar_select %p183, %s19, 0
      %s185 = smul.addr %s182, 4
      %s186 = sadd.s32 %s184, %s185
      %s187 = smul.addr %s186, 8
      %s188 = scalar_lea.vmem %s3, %s187
      %s189 = smul.u32 3, %s19
      %p190 = scmp.lt.s32.totalorder %s18, 1
      %s191 = scalar_select %p190, %s18, 1
      %p192 = scmp.lt.s32.totalorder %s189, 2
      %s193 = scalar_select %p192, %s189, 2
      %s194 = smul.addr %s191, 3
      %s195 = sadd.s32 %s193, %s194
      %s196 = smul.addr %s195, 8
      %s197 = scalar_lea.vmem %s0, %s196
      %s198 = smul.u32 3, %s19
      %p199 = scmp.lt.s32.totalorder %s18, 1
      %s200 = scalar_select %p199, %s18, 1
      %p201 = scmp.lt.s32.totalorder %s19, 0
      %s202 = scalar_select %p201, %s19, 0
      %s203 = smul.addr %s200, 4
      %s204 = sadd.s32 %s202, %s203
      %s205 = smul.addr %s204, 8
      %s206 = scalar_lea.vmem %s3, %s205
      %v207 = vld [vmem:[%s197] sm:$0xff]
      %v208 = vld [vmem:[%s197 + $0x8] sm:$0xff]
      %v209 = vld [vmem:[%s197 + $0x10] sm:$0xff]
      %v210 = vld [vmem:[%s1] sm:$0xff]
      %v211 = vld [vmem:[%s1 + $0x8] sm:$0xff]
      %v212 = vld [vmem:[%s1 + $0x10] sm:$0xff]
      %v213 = vld [vmem:[%s1 + $0x18] sm:$0xff]
      %v214 = vld [vmem:[%s1 + $0x20] sm:$0xff]
      %v215 = vld [vmem:[%s1 + $0x28] sm:$0xff]
      %v216 = vld [vmem:[%s1 + $0x30] sm:$0xff]
      %v217 = vld [vmem:[%s1 + $0x38] sm:$0xff]
      %v218 = vld [vmem:[%s2] sm:$0xff]
      %v219 = vld [vmem:[%s2 + $0x8] sm:$0xff]
      %v220 = vld [vmem:[%s2 + $0x10] sm:$0xff]
      %v221 = vld [vmem:[%s2 + $0x18] sm:$0xff]
      %v222 = vld [vmem:[%s2 + $0x20] sm:$0xff]
      %v223 = vld [vmem:[%s2 + $0x28] sm:$0xff]
      %v224 = vld [vmem:[%s2 + $0x30] sm:$0xff]
      %v225 = vld [vmem:[%s2 + $0x38] sm:$0xff]
      %227 = vset.pattern.permute.xlu0 0
      %228 = vperm.xlu0 %227, %v218
      %v229 = vpop.permute.xlu0 %228
      %232 = vset.pattern.permute.xlu0 0
      %233 = vperm.xlu0 %232, %v219
      %v234 = vpop.permute.xlu0 %233
      %237 = vset.pattern.permute.xlu0 0
      %238 = vperm.xlu0 %237, %v220
      %v239 = vpop.permute.xlu0 %238
      %242 = vset.pattern.permute.xlu0 0
      %243 = vperm.xlu0 %242, %v221
      %v244 = vpop.permute.xlu0 %243
      %247 = vset.pattern.permute.xlu0 0
      %248 = vperm.xlu0 %247, %v222
      %v249 = vpop.permute.xlu0 %248
      %252 = vset.pattern.permute.xlu0 0
      %253 = vperm.xlu0 %252, %v223
      %v254 = vpop.permute.xlu0 %253
      %257 = vset.pattern.permute.xlu0 0
      %258 = vperm.xlu0 %257, %v224
      %v259 = vpop.permute.xlu0 %258
      %262 = vset.pattern.permute.xlu0 0
      %263 = vperm.xlu0 %262, %v225
      %v264 = vpop.permute.xlu0 %263
      %vm266 = vcmask 261120
      %v268 = vsel %vm266, %v210, 0
      %v271 = vsel %vm266, %v211, 0
      %v274 = vsel %vm266, %v212, 0
      %v277 = vsel %vm266, %v213, 0
      %v280 = vsel %vm266, %v214, 0
      %v283 = vsel %vm266, %v215, 0
      %v286 = vsel %vm266, %v216, 0
      %v289 = vsel %vm266, %v217, 0
      %v292 = vsel %vm266, %v207, 0
      %v295 = vsel %vm266, %v208, 0
      %v298 = vsel %vm266, %v209, 0
      %300 = vmatpush.xpose.msra.mxu0 0.0
      %301 = vmatpush.xpose.msra.mxu0 0.0
      %302 = vmatpush.xpose.msra.mxu0 0.0
      %303 = vmatpush.xpose.msra.mxu0 0.0
      %304 = vmatpush.xpose.msra.mxu0 0.0
      %305 = vmatpush.xpose.msra.mxu0 0.0
      %306 = vmatpush.xpose.msra.mxu0 0.0
      %307 = vmatpush.xpose.msra.mxu0 0.0
      %308 = vmatpush.xpose.msra.mxu0 0.0
      %309 = vmatpush.xpose.msra.mxu0 0.0
      %310 = vmatpush.xpose.msra.mxu0 0.0
      %311 = vmatpush.xpose.msra.mxu0 0.0
      %312 = vmatpush.xpose.msra.mxu0 0.0
      %313 = vmatpush.xpose.msra.mxu0 %v298
      %314 = vmatpush.xpose.msra.mxu0 %v295
      %315 = vmatpush.xpose.msra.mxu0 %v292
      %316 = vmatmul.f32.gmra.mxu0 %v268
      %v317 = vpop.f32.mrf.mxu0
      %v318 = vadd.f32 %v229, %v317
      %319 = vmatmul.f32.gmra.mxu0 %v271
      %v320 = vpop.f32.mrf.mxu0
      %v321 = vadd.f32 %v234, %v320
      %322 = vmatmul.f32.gmra.mxu0 %v274
      %v323 = vpop.f32.mrf.mxu0
      %v324 = vadd.f32 %v239, %v323
      %325 = vmatmul.f32.gmra.mxu0 %v277
      %v326 = vpop.f32.mrf.mxu0
      %v327 = vadd.f32 %v244, %v326
      %328 = vmatmul.f32.gmra.mxu0 %v280
      %v329 = vpop.f32.mrf.mxu0
      %v330 = vadd.f32 %v249, %v329
      %331 = vmatmul.f32.gmra.mxu0 %v283
      %v332 = vpop.f32.mrf.mxu0
      %v333 = vadd.f32 %v254, %v332
      %334 = vmatmul.f32.gmra.mxu0 %v286
      %v335 = vpop.f32.mrf.mxu0
      %v336 = vadd.f32 %v259, %v335
      %337 = vmatmul.f32.gmra.mxu0 %v289
      %v338 = vpop.f32.mrf.mxu0
      %v339 = vadd.f32 %v264, %v338
      %340 = vdwg.mxu0
      %v341 = vxor.u32 %v330, 2147483648
      %v342 = vxor.u32 %v333, 2147483648
      %v343 = vxor.u32 %v336, 2147483648
      %v344 = vxor.u32 %v339, 2147483648
      %v345 = vmul.f32 %v341, 1.442695
      %v346 = vpow.pop %v345
      %v347 = vmul.f32 %v342, 1.442695
      %v348 = vpow.pop %v347
      %v349 = vmul.f32 %v343, 1.442695
      %v350 = vpow.pop %v349
      %v351 = vmul.f32 %v344, 1.442695
      %v352 = vpow.pop %v351
      %v353 = vadd.f32 %v346, 1.0
      %v354 = vadd.f32 %v348, 1.0
      %v355 = vadd.f32 %v350, 1.0
      %v356 = vadd.f32 %v352, 1.0
      %v357 = vrcp.pop %v353
      %v358 = vmul.f32 %v353, %v357
      %v359 = vsub.f32 1.0, %v358
      %v360 = vmul.f32 %v357, %v359
      %v361 = vadd.f32 %v357, %v360
      %vm362 = vweird.f32 %v353
      %vm363 = vweird.f32 %v357
      %vm364 = vmor %vm362, %vm363
      %v365 = vsel %vm364, %v357, %v361
      %v366 = vand.u32 2147483647, %v353
      %vm367 = vcmp.eq.f32.partialorder %v366, 8.507059e+37
      %v368 = vand.u32 %v353, 2147483648
      %v369 = vor.u32 1.1754944e-38, %v368
      %v370 = vsel %vm367, %v369, %v365
      %v371 = vmul.f32 1.0, %v370
      %v372 = vrcp.pop %v354
      %v373 = vmul.f32 %v354, %v372
      %v374 = vsub.f32 1.0, %v373
      %v375 = vmul.f32 %v372, %v374
      %v376 = vadd.f32 %v372, %v375
      %vm377 = vweird.f32 %v354
      %vm378 = vweird.f32 %v372
      %vm379 = vmor %vm377, %vm378
      %v380 = vsel %vm379, %v372, %v376
      %v381 = vand.u32 2147483647, %v354
      %vm382 = vcmp.eq.f32.partialorder %v381, 8.507059e+37
      %v383 = vand.u32 %v354, 2147483648
      %v384 = vor.u32 1.1754944e-38, %v383
      %v385 = vsel %vm382, %v384, %v380
      %v386 = vmul.f32 1.0, %v385
      %v387 = vrcp.pop %v355
      %v388 = vmul.f32 %v355, %v387
      %v389 = vsub.f32 1.0, %v388
      %v390 = vmul.f32 %v387, %v389
      %v391 = vadd.f32 %v387, %v390
      %vm392 = vweird.f32 %v355
      %vm393 = vweird.f32 %v387
      %vm394 = vmor %vm392, %vm393
      %v395 = vsel %vm394, %v387, %v391
      %v396 = vand.u32 2147483647, %v355
      %vm397 = vcmp.eq.f32.partialorder %v396, 8.507059e+37
      %v398 = vand.u32 %v355, 2147483648
      %v399 = vor.u32 1.1754944e-38, %v398
      %v400 = vsel %vm397, %v399, %v395
      %v401 = vmul.f32 1.0, %v400
      %v402 = vrcp.pop %v356
      %v403 = vmul.f32 %v356, %v402
      %v404 = vsub.f32 1.0, %v403
      %v405 = vmul.f32 %v402, %v404
      %v406 = vadd.f32 %v402, %v405
      %vm407 = vweird.f32 %v356
      %vm408 = vweird.f32 %v402
      %vm409 = vmor %vm407, %vm408
      %v410 = vsel %vm409, %v402, %v406
      %v411 = vand.u32 2147483647, %v356
      %vm412 = vcmp.eq.f32.partialorder %v411, 8.507059e+37
      %v413 = vand.u32 %v356, 2147483648
      %v414 = vor.u32 1.1754944e-38, %v413
      %v415 = vsel %vm412, %v414, %v410
      %v416 = vmul.f32 1.0, %v415
      %v417 = vmul.f32 %v318, %v371
      %v418 = vmul.f32 %v321, %v386
      %v419 = vmul.f32 %v324, %v401
      %v420 = vmul.f32 %v327, %v416
      %vm421 = vcmask 195584
      %422 = vst.msk [vmem:[%s206] sm:$0xff] %vm421, %v417
      %423 = vst.msk [vmem:[%s206 + $0x8] sm:$0xff] %vm421, %v418
      %424 = vst.msk [vmem:[%s206 + $0x10] sm:$0xff] %vm421, %v419
      %425 = vst.msk [vmem:[%s206 + $0x18] sm:$0xff] %vm421, %v420
      %p426 = scmp.lt.s32.totalorder %s18, 1
      %s427 = scalar_select %p426, %s18, 1
      %p428 = scmp.lt.s32.totalorder %s19, 0
      %s429 = scalar_select %p428, %s19, 0
      %s430 = smul.addr %s427, 4
      %s431 = sadd.s32 %s429, %s430
      %s432 = smul.addr %s431, 8
      %s433 = scalar_lea.vmem %s3, %s432
      // Predicated region
      $region33: #{tpu_custom_call.1} parent=31 // pred_check
        %p434 = pneg %p116
      $region34: #{tpu_custom_call.1} parent=31 // pred_check_branch
        %436 = sbr.rel (%p434) target = $region36
      $region35: #{tpu_custom_call.1} parent=31 // pred_region
        _
      $region36: #{tpu_custom_call.1} parent=31 // pred_fallthru
        _
    $region32: #{tpu_custom_call.1} parent=5 // pred_fallthru
      _
    %p437 = scmp.le.s32.totalorder 2, %s9
    // Predicated region
    $region37: #{tpu_custom_call.1} parent=5 // pred_check
      %p438 = pneg %p437
    $region38: #{tpu_custom_call.1} parent=5 // pred_check_branch
      %440 = sbr.rel (%p438) target = $region40
    $region39: #{tpu_custom_call.1} parent=5 // pred_region
      %s441 = ssub.s32 %s9, 2
      // Predicated region
      $region41: #{tpu_custom_call.1} parent=39 // pred_check
        %p442 = pneg %p122
      $region42: #{tpu_custom_call.1} parent=39 // pred_check_branch
        %444 = sbr.rel (%p442) target = $region44
      $region43: #{tpu_custom_call.1} parent=39 // pred_region
        %p445 = scmp.lt.s32.totalorder %s20, 1
        %s446 = scalar_select %p445, %s20, 1
        %p447 = scmp.lt.s32.totalorder %s21, 0
        %s448 = scalar_select %p447, %s21, 0
        %s449 = smul.addr %s446, 4
        %s450 = sadd.s32 %s448, %s449
        %s451 = smul.addr %s450, 8
        %s452 = scalar_lea.vmem %s3, %s451
      $region44: #{tpu_custom_call.1} parent=39 // pred_fallthru
        _
    $region40: #{tpu_custom_call.1} parent=5 // pred_fallthru
      _
  $region6: #{tpu_custom_call.1} parent=0 // loop_footer
    %s13 = sadd.s32 1, %s9
  $region7: #{tpu_custom_call.1} parent=0 // loop_footer_branch
    %8 = sbr.rel target = $region3
  $region8: #{tpu_custom_call.1} parent=0 // loop_exit
    _

</llo_original>
